<compile_context>
chip_gen: v7x
topology: tpu7x:2x2x1
jax: 0.10.0
libtpu: 0.0.40
codegen_flags: <defaults>
</compile_context>

<pallas_src>
import math

import jax
import jax.numpy as jnp
from jax.experimental import pallas as pl
from jax.experimental.pallas import tpu as pltpu


# ----------------------------- kernel body ----------------------------------

def _fused_mlp_kernel(num_layers):
    """Kernel: refs = (x, w0, b0, w1, b1, ..., w_{L-1}, b_{L-1}, out)."""
    def kernel(*refs):
        x_ref = refs[0]
        o_ref = refs[-1]
        h = x_ref[0]                                    # (tn, d_in), compute dtype
        for layer in range(num_layers):
            w = refs[1 + 2 * layer][0]                  # (d_in_l, d_out_l)
            b = refs[2 + 2 * layer][0]                  # (1, d_out_l), f32
            y = jnp.dot(h, w, preferred_element_type=jnp.float32) + b
            if layer < num_layers - 1:
                h = jnp.maximum(y, 0.0).astype(h.dtype)  # stay in compute dtype
            else:
                o_ref[0] = y.astype(o_ref.dtype)
    return kernel


# --------------------------- VMEM budgeting ----------------------------------

def _pad2d_bytes(rows, cols, dtype):
    """Bytes of a (rows, cols) tile after (8, 128) layout padding."""
    r = -(-rows // 8) * 8
    c = -(-cols // 128) * 128
    return r * c * jnp.dtype(dtype).itemsize


def _vmem_estimate(tn, d_in, layer_dims, compute_dtype, out_dtype):
    # double-buffered x and out blocks
    est = 2 * _pad2d_bytes(tn, d_in, compute_dtype)
    est += 2 * _pad2d_bytes(tn, layer_dims[-1][1], out_dtype)
    # resident (double-buffered) per-head weights & biases
    for di, do in layer_dims:
        est += 2 * (_pad2d_bytes(di, do, compute_dtype)
                    + _pad2d_bytes(1, do, jnp.float32))
    # live f32 intermediates inside the kernel body
    widest = max(do for _, do in layer_dims)
    est += 3 * _pad2d_bytes(tn, widest, jnp.float32)
    return est


# ------------------------------ wrapper --------------------------------------

def mlp_forward(x, params, *, tn=512, compute_dtype=None):
    """Fused MLP forward. x: (head, N, in_feats); params: [(w, b), ...]."""
    head, n, d_in = x.shape
    num_layers = len(params)
    out_dtype = x.dtype
    if compute_dtype is None:
        compute_dtype = x.dtype

    d_out = params[-1][0].shape[-1]
    d_out_pad = -(-d_out // 128) * 128              # lane-dense final store

    # Flattened inputs: x, then (w, b) per layer (last-layer w/b zero-padded).
    inputs = [x.astype(compute_dtype)]
    layer_dims = []
    for i, (w, b) in enumerate(params):
        if i == num_layers - 1 and d_out_pad != d_out:
            pad = d_out_pad - d_out
            w = jnp.pad(w, ((0, 0), (0, 0), (0, pad)))
            b = jnp.pad(b, ((0, 0), (0, 0), (0, pad)))
        inputs.append(w.astype(compute_dtype))
        inputs.append(b.astype(jnp.float32))        # bias stays f32 (f32 accum)
        layer_dims.append((w.shape[1], w.shape[2]))

    # Row-tile size: clamp to N, keep sublane aligned, respect the VMEM budget.
    tn = min(tn, n)
    if tn < n:
        tn = max(8, (tn // 8) * 8)
    budget = 24 * 1024 * 1024
    while tn > 128 and _vmem_estimate(tn, d_in, layer_dims,
                                      compute_dtype, out_dtype) > budget:
        tn = max(128, tn // 2)
    vmem_est = _vmem_estimate(tn, d_in, layer_dims, compute_dtype, out_dtype)
    vmem_limit = int(min(max(2 * vmem_est, 16 * 1024 * 1024), 32 * 1024 * 1024))

    grid = (head, pl.cdiv(n, tn))                   # head outer, row-tiles inner

    in_specs = [pl.BlockSpec((1, tn, d_in), lambda h, i: (h, i, 0))]
    for di, do in layer_dims:
        # weight/bias blocks ignore the row index -> stay VMEM resident across N
        in_specs.append(pl.BlockSpec((1, di, do), lambda h, i: (h, 0, 0)))
        in_specs.append(pl.BlockSpec((1, 1, do), lambda h, i: (h, 0, 0)))
    out_spec = pl.BlockSpec((1, tn, d_out_pad), lambda h, i: (h, i, 0))

    flops = 2 * head * n * sum(di * do for di, do in layer_dims)
    bytes_accessed = sum(int(a.size) * a.dtype.itemsize for a in inputs)
    bytes_accessed += head * n * d_out_pad * jnp.dtype(out_dtype).itemsize

    out = pl.pallas_call(
        _fused_mlp_kernel(num_layers),
        out_shape=jax.ShapeDtypeStruct((head, n, d_out_pad), out_dtype),
        grid=grid,
        in_specs=in_specs,
        out_specs=out_spec,
        compiler_params=pltpu.CompilerParams(
            dimension_semantics=("parallel", "parallel"),
            vmem_limit_bytes=vmem_limit),
        cost_estimate=pl.CostEstimate(
            flops=flops, transcendentals=0, bytes_accessed=bytes_accessed),
    )(*inputs)

    if d_out_pad != d_out:
        out = out[:, :, :d_out]
    return out


# ------------------------- params / reference --------------------------------

def init_mlp_params(key, in_feats, out_feats, hidden_size, num_layers, head):
    """Deterministic parameter init mirroring FC.reset_parameters."""
    shapes = [in_feats] + [hidden_size] * (num_layers - 1) + [out_feats]
    params = []
    gain = 1.414
    for layer in range(num_layers):
        d_in, d_out = shapes[layer], shapes[layer + 1]
        key, kw, kb = jax.random.split(key, 3)
        # xavier_uniform_ on (head, d_in, d_out):
        #   fan_in = d_in * d_out, fan_out = head * d_out (PyTorch convention)
        fan_in = d_in * d_out
        fan_out = head * d_out
        bound = gain * math.sqrt(6.0 / (fan_in + fan_out))
        w = jax.random.uniform(kw, (head, d_in, d_out), jnp.float32,
                               -bound, bound)
        # bias.uniform_(-1, 1)  (stdv = 1/sqrt(1) = 1)
        b = jax.random.uniform(kb, (head, 1, d_out), jnp.float32, -1.0, 1.0)
        params.append((w, b))
    return params


def mlp_reference(x, params):
    """Plain-JAX reference for sanity checking."""
    for w, b in params[:-1]:
        x = jnp.maximum(jnp.einsum("hnd,hde->hne", x, w) + b, 0.0)
    w, b = params[-1]
    return jnp.einsum("hnd,hde->hne", x, w) + b


# --------------------------------- main ---------------------------------------

if __name__ == "__main__":
    key = jax.random.PRNGKey(0)
    head, n, in_feats, hidden_size, out_feats, num_layers = 2, 128, 32, 64, 16, 3

    key, kx, kp = jax.random.split(key, 3)
    x = jax.random.normal(kx, (head, n, in_feats), jnp.float32)
    params = init_mlp_params(kp, in_feats, out_feats, hidden_size,
                             num_layers, head)

    # f32 compute path: exact against the plain-JAX reference.
    out = jax.block_until_ready(mlp_forward(x, params))
    ref = mlp_reference(x, params)
    assert out.shape == (head, n, out_feats)
    assert jnp.allclose(out, ref, atol=1e-4, rtol=1e-4)

    # bf16 compute path (v6e / v7x MXU fast path, f32 accumulation).
    out_bf16 = jax.block_until_ready(
        mlp_forward(x, params, compute_dtype=jnp.bfloat16))
    assert out_bf16.shape == (head, n, out_feats)
    assert jnp.allclose(out_bf16, ref, atol=1e-1, rtol=1e-1)

    # Larger N exercising the row-tiled grid (2 row tiles per head at tn=512).
    key, kx2 = jax.random.split(key)
    x2 = jax.random.normal(kx2, (head, 1024, in_feats), jnp.float32)
    out2 = jax.block_until_ready(mlp_forward(x2, params))
    ref2 = mlp_reference(x2, params)
    assert jnp.allclose(out2, ref2, atol=1e-4, rtol=1e-4)

    print("KERNEL_OK")
</pallas_src>

<mosaic_0001>
module attributes {stable_mosaic.version = 11 : i64} {
  func.func @kernel(%arg0: i32, %arg1: i32, %arg2: memref<1x128x32xf32, #tpu.memory_space<vmem>>, %arg3: memref<1x32x64xf32, #tpu.memory_space<vmem>>, %arg4: memref<1x1x64xf32, #tpu.memory_space<vmem>>, %arg5: memref<1x64x64xf32, #tpu.memory_space<vmem>>, %arg6: memref<1x1x64xf32, #tpu.memory_space<vmem>>, %arg7: memref<1x64x128xf32, #tpu.memory_space<vmem>>, %arg8: memref<1x1x128xf32, #tpu.memory_space<vmem>>, %arg9: memref<1x128x128xf32, #tpu.memory_space<vmem>>) attributes {dimension_semantics = [#tpu.dimension_semantics<parallel>, #tpu.dimension_semantics<parallel>], iteration_bounds = array<i64: 2, 1>, scalar_prefetch = 0 : i64, scratch_operands = 0 : i64, tpu.core_type = #tpu.core_type<tc>, window_params = [{transform_indices = @transform_0, window_bounds = array<i64: 1, 128, 32>}, {transform_indices = @transform_1, window_bounds = array<i64: 1, 32, 64>}, {transform_indices = @transform_2, window_bounds = array<i64: 1, 1, 64>}, {transform_indices = @transform_3, window_bounds = array<i64: 1, 64, 64>}, {transform_indices = @transform_4, window_bounds = array<i64: 1, 1, 64>}, {transform_indices = @transform_5, window_bounds = array<i64: 1, 64, 128>}, {transform_indices = @transform_6, window_bounds = array<i64: 1, 1, 128>}, {transform_indices = @transform_7, window_bounds = array<i64: 1, 128, 128>}]} {
    %c0 = arith.constant 0 : index
    %c0_0 = arith.constant 0 : index
    %c0_1 = arith.constant 0 : index
    %0 = vector.load %arg2[%c0, %c0_0, %c0_1] : memref<1x128x32xf32, #tpu.memory_space<vmem>>, vector<1x128x32xf32>
    %1 = vector.shape_cast %0 : vector<1x128x32xf32> to vector<128x32xf32>
    %c0_2 = arith.constant 0 : index
    %c0_3 = arith.constant 0 : index
    %c0_4 = arith.constant 0 : index
    %2 = vector.load %arg3[%c0_2, %c0_3, %c0_4] : memref<1x32x64xf32, #tpu.memory_space<vmem>>, vector<1x32x64xf32>
    %3 = vector.shape_cast %2 : vector<1x32x64xf32> to vector<32x64xf32>
    %c0_5 = arith.constant 0 : index
    %c0_6 = arith.constant 0 : index
    %c0_7 = arith.constant 0 : index
    %4 = vector.load %arg4[%c0_5, %c0_6, %c0_7] : memref<1x1x64xf32, #tpu.memory_space<vmem>>, vector<1x1x64xf32>
    %5 = vector.shape_cast %4 : vector<1x1x64xf32> to vector<1x64xf32>
    %cst = arith.constant dense<0.000000e+00> : vector<128x64xf32>
    %6 = tpu.matmul %1, %3, %cst {dimension_numbers = #tpu.dot_dimension_numbers<[1], [0], [0], [1], [0, 0, 1, 1], [], []>} : vector<128x32xf32>, vector<32x64xf32>, vector<128x64xf32> -> vector<128x64xf32>
    %7 = vector.broadcast %5 : vector<1x64xf32> to vector<128x64xf32>
    %8 = arith.addf %6, %7 : vector<128x64xf32>
    %cst_8 = arith.constant 0.000000e+00 : f32
    %9 = vector.broadcast %cst_8 : f32 to vector<128x64xf32>
    %10 = arith.maximumf %8, %9 : vector<128x64xf32>
    %c0_9 = arith.constant 0 : index
    %c0_10 = arith.constant 0 : index
    %c0_11 = arith.constant 0 : index
    %11 = vector.load %arg5[%c0_9, %c0_10, %c0_11] : memref<1x64x64xf32, #tpu.memory_space<vmem>>, vector<1x64x64xf32>
    %12 = vector.shape_cast %11 : vector<1x64x64xf32> to vector<64x64xf32>
    %c0_12 = arith.constant 0 : index
    %c0_13 = arith.constant 0 : index
    %c0_14 = arith.constant 0 : index
    %13 = vector.load %arg6[%c0_12, %c0_13, %c0_14] : memref<1x1x64xf32, #tpu.memory_space<vmem>>, vector<1x1x64xf32>
    %14 = vector.shape_cast %13 : vector<1x1x64xf32> to vector<1x64xf32>
    %cst_15 = arith.constant dense<0.000000e+00> : vector<128x64xf32>
    %15 = tpu.matmul %10, %12, %cst_15 {dimension_numbers = #tpu.dot_dimension_numbers<[1], [0], [0], [1], [0, 0, 1, 1], [], []>} : vector<128x64xf32>, vector<64x64xf32>, vector<128x64xf32> -> vector<128x64xf32>
    %16 = vector.broadcast %14 : vector<1x64xf32> to vector<128x64xf32>
    %17 = arith.addf %15, %16 : vector<128x64xf32>
    %cst_16 = arith.constant 0.000000e+00 : f32
    %18 = vector.broadcast %cst_16 : f32 to vector<128x64xf32>
    %19 = arith.maximumf %17, %18 : vector<128x64xf32>
    %c0_17 = arith.constant 0 : index
    %c0_18 = arith.constant 0 : index
    %c0_19 = arith.constant 0 : index
    %20 = vector.load %arg7[%c0_17, %c0_18, %c0_19] : memref<1x64x128xf32, #tpu.memory_space<vmem>>, vector<1x64x128xf32>
    %21 = vector.shape_cast %20 : vector<1x64x128xf32> to vector<64x128xf32>
    %c0_20 = arith.constant 0 : index
    %c0_21 = arith.constant 0 : index
    %c0_22 = arith.constant 0 : index
    %22 = vector.load %arg8[%c0_20, %c0_21, %c0_22] : memref<1x1x128xf32, #tpu.memory_space<vmem>>, vector<1x1x128xf32>
    %23 = vector.shape_cast %22 : vector<1x1x128xf32> to vector<1x128xf32>
    %cst_23 = arith.constant dense<0.000000e+00> : vector<128x128xf32>
    %24 = tpu.matmul %19, %21, %cst_23 {dimension_numbers = #tpu.dot_dimension_numbers<[1], [0], [0], [1], [0, 0, 1, 1], [], []>} : vector<128x64xf32>, vector<64x128xf32>, vector<128x128xf32> -> vector<128x128xf32>
    %25 = vector.broadcast %23 : vector<1x128xf32> to vector<128x128xf32>
    %26 = arith.addf %24, %25 : vector<128x128xf32>
    %c0_24 = arith.constant 0 : index
    %c0_25 = arith.constant 0 : index
    %c0_26 = arith.constant 0 : index
    %27 = vector.load %arg9[%c0_24, %c0_25, %c0_26] : memref<1x128x128xf32, #tpu.memory_space<vmem>>, vector<1x128x128xf32>
    %28 = vector.shape_cast %27 : vector<1x128x128xf32> to vector<128x128xf32>
    %29 = vector.shape_cast %26 : vector<128x128xf32> to vector<1x128x128xf32>
    tpu.vector_store %arg9[%c0_24, %c0_25, %c0_26], %29 {strides = array<i32>} : memref<1x128x128xf32, #tpu.memory_space<vmem>>, vector<1x128x128xf32>,
    return
  }
  func.func @transform_0(%arg0: i32, %arg1: i32) -> (i32, i32, i32) {
    %c0_i32 = arith.constant 0 : i32
    %c0_i32_0 = arith.constant 0 : i32
    return %arg0, %arg1, %c0_i32 : i32, i32, i32
  }
  func.func @transform_1(%arg0: i32, %arg1: i32) -> (i32, i32, i32) {
    %c0_i32 = arith.constant 0 : i32
    %c0_i32_0 = arith.constant 0 : i32
    %c0_i32_1 = arith.constant 0 : i32
    return %arg0, %c0_i32, %c0_i32_0 : i32, i32, i32
  }
  func.func @transform_2(%arg0: i32, %arg1: i32) -> (i32, i32, i32) {
    %c0_i32 = arith.constant 0 : i32
    %c0_i32_0 = arith.constant 0 : i32
    %c0_i32_1 = arith.constant 0 : i32
    return %arg0, %c0_i32, %c0_i32_0 : i32, i32, i32
  }
  func.func @transform_3(%arg0: i32, %arg1: i32) -> (i32, i32, i32) {
    %c0_i32 = arith.constant 0 : i32
    %c0_i32_0 = arith.constant 0 : i32
    %c0_i32_1 = arith.constant 0 : i32
    return %arg0, %c0_i32, %c0_i32_0 : i32, i32, i32
  }
  func.func @transform_4(%arg0: i32, %arg1: i32) -> (i32, i32, i32) {
    %c0_i32 = arith.constant 0 : i32
    %c0_i32_0 = arith.constant 0 : i32
    %c0_i32_1 = arith.constant 0 : i32
    return %arg0, %c0_i32, %c0_i32_0 : i32, i32, i32
  }
  func.func @transform_5(%arg0: i32, %arg1: i32) -> (i32, i32, i32) {
    %c0_i32 = arith.constant 0 : i32
    %c0_i32_0 = arith.constant 0 : i32
    %c0_i32_1 = arith.constant 0 : i32
    return %arg0, %c0_i32, %c0_i32_0 : i32, i32, i32
  }
  func.func @transform_6(%arg0: i32, %arg1: i32) -> (i32, i32, i32) {
    %c0_i32 = arith.constant 0 : i32
    %c0_i32_0 = arith.constant 0 : i32
    %c0_i32_1 = arith.constant 0 : i32
    return %arg0, %c0_i32, %c0_i32_0 : i32, i32, i32
  }
  func.func @transform_7(%arg0: i32, %arg1: i32) -> (i32, i32, i32) {
    %c0_i32 = arith.constant 0 : i32
    %c0_i32_0 = arith.constant 0 : i32
    return %arg0, %arg1, %c0_i32 : i32, i32, i32
  }
}

</mosaic_0001>

<llo_original>
// kernel: tpu_custom_call.1
$region0: #{tpu_custom_call.1}
  #allocation0 [shape = 'u32[]', space=smem, size = 0x4, offset = 0x4, fixed_abs, tag = 'smem constant byte address 0x4 - core index']
  #allocation1 [shape = 'u32[144,128]{1,0:T(1,128)}', space=vmem, size = 0x12000, scoped, tag = 'internal scratch']
  %s0 = inlined_call_operand.vmem [shape: f32[2,128,32], index: 0, kind: input, shape index: {}]
  %s1 = inlined_call_operand.vmem [shape: f32[2,32,64], index: 1, kind: input, shape index: {}]
  %s2 = inlined_call_operand.vmem [shape: f32[2,1,64], index: 2, kind: input, shape index: {}]
  %s3 = inlined_call_operand.vmem [shape: f32[2,64,64], index: 3, kind: input, shape index: {}]
  %s4 = inlined_call_operand.vmem [shape: f32[2,1,64], index: 4, kind: input, shape index: {}]
  %s5 = inlined_call_operand.vmem [shape: f32[2,64,128], index: 5, kind: input, shape index: {}]
  %s6 = inlined_call_operand.vmem [shape: f32[2,1,128], index: 6, kind: input, shape index: {}]
  %s7 = inlined_call_operand.hbm [shape: f32[2,128,128], index: 7, kind: output, shape index: {}]
  %s8 = sld [smem:[#allocation0]]
  $region61: #{tpu_custom_call.1} parent=0
    _
  %s10 = ssub.s32 1, %s8
  %s11 = scalar_select 0, %s10, %s8
  $region1: #{tpu_custom_call.1} parent=0
    #allocation2 [shape = 'u8[131072]{0}', space=vmem, size = 0x20000, scoped, tag = 'output window, operand 0']
    #allocation3 [shape = 's32[2]{0}', space=sflag, size = 0x8, scoped, tag = 'scoped memory for tpu_custom_call.1']
    %12 = vsyncpa [#allocation3], 0
    %s13 = scalar_lea.sflag [#allocation3], 1
    %14 = vsyncpa %s13, 0
    loop: start=0, step=1, limit=4
    $region2: #{tpu_custom_call.1} parent=1 // loop_pre_header
      _
    $region3: #{tpu_custom_call.1} parent=1 // loop_header
      %s16 = sphi 0, %s20
      %p17 = scmp.ge.s32.totalorder %s16, 4
      %s23 = sphi 0, %s35
      %s24 = sphi 0, %s31
      %s25 = sphi 0, %s23
      %s26 = sphi 0, %s24
      %s27 = sphi 0, %s25
      %s28 = sphi 0, %s26
      %s40 = sphi 0, %s42
      %s43 = sphi 0, %s40
      %s44 = sphi 0, %s43
      %s60 = sphi 0, %s44
      %s66 = sphi 0, %s68
      %s69 = sphi 0, %s66
      %s70 = sphi 0, %s69
      %s86 = sphi 0, %s70
      %s92 = sphi 0, %s94
      %s95 = sphi 0, %s92
      %s96 = sphi 0, %s95
      %s112 = sphi 0, %s96
      %s118 = sphi 0, %s120
      %s121 = sphi 0, %s118
      %s122 = sphi 0, %s121
      %s138 = sphi 0, %s122
      %s144 = sphi 0, %s146
      %s147 = sphi 0, %s144
      %s148 = sphi 0, %s147
      %s164 = sphi 0, %s148
      %s170 = sphi 0, %s172
      %s173 = sphi 0, %s170
      %s174 = sphi 0, %s173
      %s190 = sphi 0, %s174
      %s196 = sphi 0, %s198
      %s199 = sphi 0, %s196
      %s200 = sphi 0, %s199
      %s216 = sphi 0, %s200
      %s224 = sphi 0, %s226
      %s227 = sphi 0, %s224
      %s228 = sphi 0, %s227
      %s244 = sphi 0, %s228
    $region4: #{tpu_custom_call.1} parent=1 // loop_header_branch
      %19 = sbr.rel (%p17) target = $region8
    $region5: #{tpu_custom_call.1} parent=1 // loop_body
      %s21 = ssub.s32 %s16, 1
      %s22 = ssub.s32 %s16, 2
      %s29 = sadd.s32 1, %s24
      %p30 = scmp.ge.s32.totalorder %s29, 1
      %s31 = scalar_select %p30, 0, %s29
      %s32 = sadd.s32 1, %s23
      %s33 = scalar_select %p30, %s32, %s23
      %p34 = scmp.ge.s32.totalorder %s33, 2
      %s35 = scalar_select %p34, 0, %s33
      %s36 = ssub.s32 %s23, %s35
      %s37 = ssub.s32 %s24, %s31
      %s38 = sor.u32 %s36, %s37
      %p39 = scmp.eq.s32.totalorder %s38, 0
      %s41 = sadd.s32 %s40, 1
      %s42 = scalar_select %p39, %s40, %s41
      %p45 = pneg %p39
      %p46 = scmp.eq.s32.totalorder %s16, 1
      %p47 = por %p45, %p46
      %p48 = scmp.ne.s32.totalorder %s40, %s43
      %p49 = scmp.eq.s32.totalorder %s16, 0
      %p50 = por %p48, %p49
      %p51 = scmp.ne.s32.totalorder %s40, %s43
      %p52 = scmp.eq.s32.totalorder %s21, 1
      %p53 = por %p51, %p52
      %p54 = scmp.ne.s32.totalorder %s43, %s44
      %p55 = scmp.eq.s32.totalorder %s21, 0
      %p56 = por %p54, %p55
      %p57 = scmp.ne.s32.totalorder %s43, %s44
      %p58 = scmp.eq.s32.totalorder %s22, 1
      %p59 = por %p57, %p58
      %p61 = scmp.ne.s32.totalorder %s44, %s60
      %p62 = scmp.eq.s32.totalorder %s22, 0
      %p63 = por %p61, %p62
      %s64 = ssub.s32 %s23, %s35
      %p65 = scmp.eq.s32.totalorder %s64, 0
      %s67 = sadd.s32 %s66, 1
      %s68 = scalar_select %p65, %s66, %s67
      %p71 = pneg %p65
      %p72 = scmp.eq.s32.totalorder %s16, 1
      %p73 = por %p71, %p72
      %p74 = scmp.ne.s32.totalorder %s66, %s69
      %p75 = scmp.eq.s32.totalorder %s16, 0
      %p76 = por %p74, %p75
      %p77 = scmp.ne.s32.totalorder %s66, %s69
      %p78 = scmp.eq.s32.totalorder %s21, 1
      %p79 = por %p77, %p78
      %p80 = scmp.ne.s32.totalorder %s69, %s70
      %p81 = scmp.eq.s32.totalorder %s21, 0
      %p82 = por %p80, %p81
      %p83 = scmp.ne.s32.totalorder %s69, %s70
      %p84 = scmp.eq.s32.totalorder %s22, 1
      %p85 = por %p83, %p84
      %p87 = scmp.ne.s32.totalorder %s70, %s86
      %p88 = scmp.eq.s32.totalorder %s22, 0
      %p89 = por %p87, %p88
      %s90 = ssub.s32 %s23, %s35
      %p91 = scmp.eq.s32.totalorder %s90, 0
      %s93 = sadd.s32 %s92, 1
      %s94 = scalar_select %p91, %s92, %s93
      %p97 = pneg %p91
      %p98 = scmp.eq.s32.totalorder %s16, 1
      %p99 = por %p97, %p98
      %p100 = scmp.ne.s32.totalorder %s92, %s95
      %p101 = scmp.eq.s32.totalorder %s16, 0
      %p102 = por %p100, %p101
      %p103 = scmp.ne.s32.totalorder %s92, %s95
      %p104 = scmp.eq.s32.totalorder %s21, 1
      %p105 = por %p103, %p104
      %p106 = scmp.ne.s32.totalorder %s95, %s96
      %p107 = scmp.eq.s32.totalorder %s21, 0
      %p108 = por %p106, %p107
      %p109 = scmp.ne.s32.totalorder %s95, %s96
      %p110 = scmp.eq.s32.totalorder %s22, 1
      %p111 = por %p109, %p110
      %p113 = scmp.ne.s32.totalorder %s96, %s112
      %p114 = scmp.eq.s32.totalorder %s22, 0
      %p115 = por %p113, %p114
      %s116 = ssub.s32 %s23, %s35
      %p117 = scmp.eq.s32.totalorder %s116, 0
      %s119 = sadd.s32 %s118, 1
      %s120 = scalar_select %p117, %s118, %s119
      %p123 = pneg %p117
      %p124 = scmp.eq.s32.totalorder %s16, 1
      %p125 = por %p123, %p124
      %p126 = scmp.ne.s32.totalorder %s118, %s121
      %p127 = scmp.eq.s32.totalorder %s16, 0
      %p128 = por %p126, %p127
      %p129 = scmp.ne.s32.totalorder %s118, %s121
      %p130 = scmp.eq.s32.totalorder %s21, 1
      %p131 = por %p129, %p130
      %p132 = scmp.ne.s32.totalorder %s121, %s122
      %p133 = scmp.eq.s32.totalorder %s21, 0
      %p134 = por %p132, %p133
      %p135 = scmp.ne.s32.totalorder %s121, %s122
      %p136 = scmp.eq.s32.totalorder %s22, 1
      %p137 = por %p135, %p136
      %p139 = scmp.ne.s32.totalorder %s122, %s138
      %p140 = scmp.eq.s32.totalorder %s22, 0
      %p141 = por %p139, %p140
      %s142 = ssub.s32 %s23, %s35
      %p143 = scmp.eq.s32.totalorder %s142, 0
      %s145 = sadd.s32 %s144, 1
      %s146 = scalar_select %p143, %s144, %s145
      %p149 = pneg %p143
      %p150 = scmp.eq.s32.totalorder %s16, 1
      %p151 = por %p149, %p150
      %p152 = scmp.ne.s32.totalorder %s144, %s147
      %p153 = scmp.eq.s32.totalorder %s16, 0
      %p154 = por %p152, %p153
      %p155 = scmp.ne.s32.totalorder %s144, %s147
      %p156 = scmp.eq.s32.totalorder %s21, 1
      %p157 = por %p155, %p156
      %p158 = scmp.ne.s32.totalorder %s147, %s148
      %p159 = scmp.eq.s32.totalorder %s21, 0
      %p160 = por %p158, %p159
      %p161 = scmp.ne.s32.totalorder %s147, %s148
      %p162 = scmp.eq.s32.totalorder %s22, 1
      %p163 = por %p161, %p162
      %p165 = scmp.ne.s32.totalorder %s148, %s164
      %p166 = scmp.eq.s32.totalorder %s22, 0
      %p167 = por %p165, %p166
      %s168 = ssub.s32 %s23, %s35
      %p169 = scmp.eq.s32.totalorder %s168, 0
      %s171 = sadd.s32 %s170, 1
      %s172 = scalar_select %p169, %s170, %s171
      %p175 = pneg %p169
      %p176 = scmp.eq.s32.totalorder %s16, 1
      %p177 = por %p175, %p176
      %p178 = scmp.ne.s32.totalorder %s170, %s173
      %p179 = scmp.eq.s32.totalorder %s16, 0
      %p180 = por %p178, %p179
      %p181 = scmp.ne.s32.totalorder %s170, %s173
      %p182 = scmp.eq.s32.totalorder %s21, 1
      %p183 = por %p181, %p182
      %p184 = scmp.ne.s32.totalorder %s173, %s174
      %p185 = scmp.eq.s32.totalorder %s21, 0
      %p186 = por %p184, %p185
      %p187 = scmp.ne.s32.totalorder %s173, %s174
      %p188 = scmp.eq.s32.totalorder %s22, 1
      %p189 = por %p187, %p188
      %p191 = scmp.ne.s32.totalorder %s174, %s190
      %p192 = scmp.eq.s32.totalorder %s22, 0
      %p193 = por %p191, %p192
      %s194 = ssub.s32 %s23, %s35
      %p195 = scmp.eq.s32.totalorder %s194, 0
      %s197 = sadd.s32 %s196, 1
      %s198 = scalar_select %p195, %s196, %s197
      %p201 = pneg %p195
      %p202 = scmp.eq.s32.totalorder %s16, 1
      %p203 = por %p201, %p202
      %p204 = scmp.ne.s32.totalorder %s196, %s199
      %p205 = scmp.eq.s32.totalorder %s16, 0
      %p206 = por %p204, %p205
      %p207 = scmp.ne.s32.totalorder %s196, %s199
      %p208 = scmp.eq.s32.totalorder %s21, 1
      %p209 = por %p207, %p208
      %p210 = scmp.ne.s32.totalorder %s199, %s200
      %p211 = scmp.eq.s32.totalorder %s21, 0
      %p212 = por %p210, %p211
      %p213 = scmp.ne.s32.totalorder %s199, %s200
      %p214 = scmp.eq.s32.totalorder %s22, 1
      %p215 = por %p213, %p214
      %p217 = scmp.ne.s32.totalorder %s200, %s216
      %p218 = scmp.eq.s32.totalorder %s22, 0
      %p219 = por %p217, %p218
      %s220 = ssub.s32 %s23, %s35
      %s221 = ssub.s32 %s24, %s31
      %s222 = sor.u32 %s220, %s221
      %p223 = scmp.eq.s32.totalorder %s222, 0
      %s225 = sadd.s32 %s224, 1
      %s226 = scalar_select %p223, %s224, %s225
      %p229 = pneg %p223
      %p230 = scmp.eq.s32.totalorder %s16, 1
      %p231 = por %p229, %p230
      %p232 = scmp.ne.s32.totalorder %s224, %s227
      %p233 = scmp.eq.s32.totalorder %s16, 0
      %p234 = por %p232, %p233
      %p235 = scmp.ne.s32.totalorder %s224, %s227
      %p236 = scmp.eq.s32.totalorder %s21, 1
      %p237 = por %p235, %p236
      %p238 = scmp.ne.s32.totalorder %s227, %s228
      %p239 = scmp.eq.s32.totalorder %s21, 0
      %p240 = por %p238, %p239
      %p241 = scmp.ne.s32.totalorder %s227, %s228
      %p242 = scmp.eq.s32.totalorder %s22, 1
      %p243 = por %p241, %p242
      %p245 = scmp.ne.s32.totalorder %s228, %s244
      %p246 = scmp.eq.s32.totalorder %s22, 0
      %p247 = por %p245, %p246
      %p248 = scmp.le.s32.totalorder 1, %s16
      %p249 = scmp.lt.s32.totalorder %s16, 3
      %p250 = pnand %p248, %p249
      %p251 = pneg %p250
      // Predicated region
      $region9: #{tpu_custom_call.1} parent=5 // pred_check
        _
      $region10: #{tpu_custom_call.1} parent=5 // pred_check_branch
        %253 = sbr.rel (%p250) target = $region12
      $region11: #{tpu_custom_call.1} parent=5 // pred_region
        %s254 = ssub.s32 %s16, 1
      $region12: #{tpu_custom_call.1} parent=5 // pred_fallthru
        _
      %p255 = scmp.lt.s32.totalorder %s16, 2
      // Predicated region
      $region13: #{tpu_custom_call.1} parent=5 // pred_check
        %p256 = pneg %p255
      $region14: #{tpu_custom_call.1} parent=5 // pred_check_branch
        %258 = sbr.rel (%p256) target = $region16
      $region15: #{tpu_custom_call.1} parent=5 // pred_region
        // Predicated region
        $region17: #{tpu_custom_call.1} parent=15 // pred_check
          %p259 = pneg %p50
        $region18: #{tpu_custom_call.1} parent=15 // pred_check_branch
          %261 = sbr.rel (%p259) target = $region20
        $region19: #{tpu_custom_call.1} parent=15 // pred_region
          %s262 = smul.u32 16, %s24
          %p263 = scmp.lt.s32.totalorder %s23, 1
          %s264 = scalar_select %p263, %s23, 1
          %p265 = scmp.lt.s32.totalorder %s262, 15
          %s266 = scalar_select %p265, %s262, 15
          %s267 = smul.addr %s264, 16
          %s268 = sadd.s32 %s266, %s267
          %s269 = smul.addr %s268, 8
          %s270 = scalar_lea.vmem %s0, %s269
          %s271 = smul.u32 16, %s24
        $region20: #{tpu_custom_call.1} parent=15 // pred_fallthru
          _
        // Predicated region
        $region21: #{tpu_custom_call.1} parent=15 // pred_check
          %p272 = pneg %p76
        $region22: #{tpu_custom_call.1} parent=15 // pred_check_branch
          %274 = sbr.rel (%p272) target = $region24
        $region23: #{tpu_custom_call.1} parent=15 // pred_region
          %p275 = scmp.lt.s32.totalorder %s23, 1
          %s276 = scalar_select %p275, %s23, 1
          %s277 = smul.addr %s276, 4
          %s278 = smul.addr %s277, 8
          %s279 = scalar_lea.vmem %s1, %s278
        $region24: #{tpu_custom_call.1} parent=15 // pred_fallthru
          _
        // Predicated region
        $region25: #{tpu_custom_call.1} parent=15 // pred_check
          %p280 = pneg %p102
        $region26: #{tpu_custom_call.1} parent=15 // pred_check_branch
          %282 = sbr.rel (%p280) target = $region28
        $region27: #{tpu_custom_call.1} parent=15 // pred_region
          %p283 = scmp.lt.s32.totalorder %s23, 1
          %s284 = scalar_select %p283, %s23, 1
          %s285 = scalar_lea.vmem %s2, %s284
        $region28: #{tpu_custom_call.1} parent=15 // pred_fallthru
          _
        // Predicated region
        $region29: #{tpu_custom_call.1} parent=15 // pred_check
          %p286 = pneg %p128
        $region30: #{tpu_custom_call.1} parent=15 // pred_check_branch
          %288 = sbr.rel (%p286) target = $region32
        $region31: #{tpu_custom_call.1} parent=15 // pred_region
          %p289 = scmp.lt.s32.totalorder %s23, 1
          %s290 = scalar_select %p289, %s23, 1
          %s291 = smul.addr %s290, 8
          %s292 = smul.addr %s291, 8
          %s293 = scalar_lea.vmem %s3, %s292
        $region32: #{tpu_custom_call.1} parent=15 // pred_fallthru
          _
        // Predicated region
        $region33: #{tpu_custom_call.1} parent=15 // pred_check
          %p294 = pneg %p154
        $region34: #{tpu_custom_call.1} parent=15 // pred_check_branch
          %296 = sbr.rel (%p294) target = $region36
        $region35: #{tpu_custom_call.1} parent=15 // pred_region
          %p297 = scmp.lt.s32.totalorder %s23, 1
          %s298 = scalar_select %p297, %s23, 1
          %s299 = scalar_lea.vmem %s4, %s298
        $region36: #{tpu_custom_call.1} parent=15 // pred_fallthru
          _
        // Predicated region
        $region37: #{tpu_custom_call.1} parent=15 // pred_check
          %p300 = pneg %p180
        $region38: #{tpu_custom_call.1} parent=15 // pred_check_branch
          %302 = sbr.rel (%p300) target = $region40
        $region39: #{tpu_custom_call.1} parent=15 // pred_region
          %p303 = scmp.lt.s32.totalorder %s23, 1
          %s304 = scalar_select %p303, %s23, 1
          %s305 = smul.addr %s304, 8
          %s306 = smul.addr %s305, 8
          %s307 = scalar_lea.vmem %s5, %s306
        $region40: #{tpu_custom_call.1} parent=15 // pred_fallthru
          _
        // Predicated region
        $region41: #{tpu_custom_call.1} parent=15 // pred_check
          %p308 = pneg %p206
        $region42: #{tpu_custom_call.1} parent=15 // pred_check_branch
          %310 = sbr.rel (%p308) target = $region44
        $region43: #{tpu_custom_call.1} parent=15 // pred_region
          %p311 = scmp.lt.s32.totalorder %s23, 1
          %s312 = scalar_select %p311, %s23, 1
          %s313 = scalar_lea.vmem %s6, %s312
        $region44: #{tpu_custom_call.1} parent=15 // pred_fallthru
          _
      $region16: #{tpu_custom_call.1} parent=5 // pred_fallthru
        _
      %p314 = scmp.le.s32.totalorder 1, %s16
      %p315 = scmp.lt.s32.totalorder %s16, 3
      %p316 = pnand %p314, %p315
      %p317 = pneg %p316
      // Predicated region
      $region45: #{tpu_custom_call.1} parent=5 // pred_check
        _
      $region46: #{tpu_custom_call.1} parent=5 // pred_check_branch
        %319 = sbr.rel (%p316) target = $region48
      $region47: #{tpu_custom_call.1} parent=5 // pred_region
        %s320 = ssub.s32 %s16, 1
        %s321 = smul.u32 16, %s26
        %p322 = scmp.lt.s32.totalorder %s25, 1
        %s323 = scalar_select %p322, %s25, 1
        %p324 = scmp.lt.s32.totalorder %s321, 15
        %s325 = scalar_select %p324, %s321, 15
        %s326 = smul.addr %s323, 16
        %s327 = sadd.s32 %s325, %s326
        %s328 = smul.addr %s327, 8
        %s329 = scalar_lea.vmem %s0, %s328
        %p330 = pneg %p56
        %p331 = pneg %p53
        %p332 = scmp.lt.s32.totalorder %s25, 1
        %s333 = scalar_select %p332, %s25, 1
        %s334 = smul.addr %s333, 4
        %s335 = smul.addr %s334, 8
        %s336 = scalar_lea.vmem %s1, %s335
        %p337 = pneg %p82
        %p338 = pneg %p79
        %p339 = scmp.lt.s32.totalorder %s25, 1
        %s340 = scalar_select %p339, %s25, 1
        %s341 = scalar_lea.vmem %s2, %s340
        %p342 = pneg %p108
        %p343 = pneg %p105
        %p344 = scmp.lt.s32.totalorder %s25, 1
        %s345 = scalar_select %p344, %s25, 1
        %s346 = smul.addr %s345, 8
        %s347 = smul.addr %s346, 8
        %s348 = scalar_lea.vmem %s3, %s347
        %p349 = pneg %p134
        %p350 = pneg %p131
        %p351 = scmp.lt.s32.totalorder %s25, 1
        %s352 = scalar_select %p351, %s25, 1
        %s353 = scalar_lea.vmem %s4, %s352
        %p354 = pneg %p160
        %p355 = pneg %p157
        %p356 = scmp.lt.s32.totalorder %s25, 1
        %s357 = scalar_select %p356, %s25, 1
        %s358 = smul.addr %s357, 8
        %s359 = smul.addr %s358, 8
        %s360 = scalar_lea.vmem %s5, %s359
        %p361 = pneg %p186
        %p362 = pneg %p183
        %p363 = scmp.lt.s32.totalorder %s25, 1
        %s364 = scalar_select %p363, %s25, 1
        %s365 = scalar_lea.vmem %s6, %s364
        %p366 = pneg %p212
        %p367 = pneg %p209
        %p368 = pneg %p240
        %p369 = pneg %p237
        %s370 = sand.u32 %s227, 1
        %s371 = scalar_lea.sflag [#allocation3], %s370
        %s372 = sand.u32 %s227, 1
        %s373 = smul.addr %s372, 128
        %s374 = scalar_lea.vmem [#allocation2], %s373
        %s375 = smul.u32 16, %s26
        %p376 = scmp.lt.s32.totalorder %s25, 1
        %s377 = scalar_select %p376, %s25, 1
        %p378 = scmp.lt.s32.totalorder %s375, 15
        %s379 = scalar_select %p378, %s375, 15
        %s380 = smul.addr %s377, 16
        %s381 = sadd.s32 %s379, %s380
        %s382 = smul.addr %s381, 8
        %s383 = scalar_lea.vmem %s0, %s382
        %s384 = smul.u32 16, %s26
        %p385 = scmp.lt.s32.totalorder %s25, 1
        %s386 = scalar_select %p385, %s25, 1
        %s387 = smul.addr %s386, 4
        %s388 = smul.addr %s387, 8
        %s389 = scalar_lea.vmem %s1, %s388
        %p390 = scmp.lt.s32.totalorder %s25, 1
        %s391 = scalar_select %p390, %s25, 1
        %s392 = scalar_lea.vmem %s2, %s391
        %p393 = scmp.lt.s32.totalorder %s25, 1
        %s394 = scalar_select %p393, %s25, 1
        %s395 = smul.addr %s394, 8
        %s396 = smul.addr %s395, 8
        %s397 = scalar_lea.vmem %s3, %s396
        %p398 = scmp.lt.s32.totalorder %s25, 1
        %s399 = scalar_select %p398, %s25, 1
        %s400 = scalar_lea.vmem %s4, %s399
        %p401 = scmp.lt.s32.totalorder %s25, 1
        %s402 = scalar_select %p401, %s25, 1
        %s403 = smul.addr %s402, 8
        %s404 = smul.addr %s403, 8
        %s405 = scalar_lea.vmem %s5, %s404
        %p406 = scmp.lt.s32.totalorder %s25, 1
        %s407 = scalar_select %p406, %s25, 1
        %s408 = scalar_lea.vmem %s6, %s407
        %s409 = smul.u32 16, %s26
        %v410 = vld [vmem:[%s383] sm:$0xff]
        %v411 = vld [vmem:[%s383 + $0x8] sm:$0xff]
        %v412 = vld [vmem:[%s383 + $0x10] sm:$0xff]
        %v413 = vld [vmem:[%s383 + $0x18] sm:$0xff]
        %v414 = vld [vmem:[%s383 + $0x20] sm:$0xff]
        %v415 = vld [vmem:[%s383 + $0x28] sm:$0xff]
        %v416 = vld [vmem:[%s383 + $0x30] sm:$0xff]
        %v417 = vld [vmem:[%s383 + $0x38] sm:$0xff]
        %v418 = vld [vmem:[%s383 + $0x40] sm:$0xff]
        %v419 = vld [vmem:[%s383 + $0x48] sm:$0xff]
        %v420 = vld [vmem:[%s383 + $0x50] sm:$0xff]
        %v421 = vld [vmem:[%s383 + $0x58] sm:$0xff]
        %v422 = vld [vmem:[%s383 + $0x60] sm:$0xff]
        %v423 = vld [vmem:[%s383 + $0x68] sm:$0xff]
        %v424 = vld [vmem:[%s383 + $0x70] sm:$0xff]
        %v425 = vld [vmem:[%s383 + $0x78] sm:$0xff]
        %v426 = vld [vmem:[%s389] sm:$0xff]
        %v427 = vld [vmem:[%s389 + $0x8] sm:$0xff]
        %v428 = vld [vmem:[%s389 + $0x10] sm:$0xff]
        %v429 = vld [vmem:[%s389 + $0x18] sm:$0xff]
        %v430 = vld [vmem:[%s392] sm:$0x1]
        %v432 = vlaneseq
        %v433 = vshrl.u32 %v432, 7
        %v434 = vsub.s32 0, %v433
        %v435 = vrot.slane %v430, %v434
        %vm437 = vcmask 261120
        %v439 = vsel %vm437, %v410, 0
        %v442 = vsel %vm437, %v411, 0
        %v445 = vsel %vm437, %v412, 0
        %v448 = vsel %vm437, %v413, 0
        %v451 = vsel %vm437, %v414, 0
        %v454 = vsel %vm437, %v415, 0
        %v457 = vsel %vm437, %v416, 0
        %v460 = vsel %vm437, %v417, 0
        %v463 = vsel %vm437, %v418, 0
        %v466 = vsel %vm437, %v419, 0
        %v469 = vsel %vm437, %v420, 0
        %v472 = vsel %vm437, %v421, 0
        %v475 = vsel %vm437, %v422, 0
        %v478 = vsel %vm437, %v423, 0
        %v481 = vsel %vm437, %v424, 0
        %v484 = vsel %vm437, %v425, 0
        %486 = vmatprep.subr.mxu0 0.0
        %487 = vmatpush1.msra.mxu0 %v426
        %488 = vmatprep.subr.mxu0 0.0
        %489 = vmatpush1.msra.mxu0 %v427
        %490 = vmatprep.subr.mxu0 0.0
        %491 = vmatpush1.msra.mxu0 %v428
        %492 = vmatprep.subr.mxu0 0.0
        %493 = vmatpush1.msra.mxu0 %v429
        %494 = vmatprep.subr.mxu0 0.0
        %495 = vmatpush1.msra.mxu0 0.0
        %496 = vmatprep.subr.mxu0 0.0
        %497 = vmatpush1.msra.mxu0 0.0
        %498 = vmatprep.subr.mxu0 0.0
        %499 = vmatpush1.msra.mxu0 0.0
        %500 = vmatprep.subr.mxu0 0.0
        %501 = vmatpush1.msra.mxu0 0.0
        %502 = vmatprep.subr.mxu0 0.0
        %503 = vmatpush1.msra.mxu0 0.0
        %504 = vmatprep.subr.mxu0 0.0
        %505 = vmatpush1.msra.mxu0 0.0
        %506 = vmatprep.subr.mxu0 0.0
        %507 = vmatpush1.msra.mxu0 0.0
        %508 = vmatprep.subr.mxu0 0.0
        %509 = vmatpush1.msra.mxu0 0.0
        %510 = vmatprep.subr.mxu0 0.0
        %511 = vmatpush1.msra.mxu0 0.0
        %512 = vmatprep.subr.mxu0 0.0
        %513 = vmatpush1.msra.mxu0 0.0
        %514 = vmatprep.subr.mxu0 0.0
        %515 = vmatpush1.msra.mxu0 0.0
        %516 = vmatprep.subr.mxu0 0.0
        %517 = vmatpush1.msra.mxu0 0.0
        %518 = vmatprep.subr.mxu0 0.0
        %519 = vmatpush1.msra.mxu0 0.0
        %520 = vmatprep.subr.mxu0 0.0
        %521 = vmatpush1.msra.mxu0 0.0
        %522 = vmatprep.subr.mxu0 0.0
        %523 = vmatpush1.msra.mxu0 0.0
        %524 = vmatprep.subr.mxu0 0.0
        %525 = vmatpush1.msra.mxu0 0.0
        %526 = vmatprep.subr.mxu0 0.0
        %527 = vmatpush1.msra.mxu0 0.0
        %528 = vmatprep.subr.mxu0 0.0
        %529 = vmatpush1.msra.mxu0 0.0
        %530 = vmatprep.subr.mxu0 0.0
        %531 = vmatpush1.msra.mxu0 0.0
        %532 = vmatprep.subr.mxu0 0.0
        %533 = vmatpush1.msra.mxu0 0.0
        %534 = vmatprep.subr.mxu0 0.0
        %535 = vmatpush1.msra.mxu0 0.0
        %536 = vmatprep.subr.mxu0 0.0
        %537 = vmatpush1.msra.mxu0 0.0
        %538 = vmatprep.subr.mxu0 0.0
        %539 = vmatpush1.msra.mxu0 0.0
        %540 = vmatprep.subr.mxu0 0.0
        %541 = vmatpush1.msra.mxu0 0.0
        %542 = vmatprep.subr.mxu0 0.0
        %543 = vmatpush1.msra.mxu0 0.0
        %544 = vmatprep.subr.mxu0 0.0
        %545 = vmatpush1.msra.mxu0 0.0
        %546 = vmatprep.subr.mxu0 0.0
        %547 = vmatpush1.msra.mxu0 0.0
        %548 = vmatprep.subr.mxu0 0.0
        %549 = vmatpush1.msra.mxu0 0.0
        %550 = vmatprep.mubr.f32.mxu0 0.0
        %551 = vmatmul.mubr.f32.gmra.mrb[0].mxu0 %v439
        %v552 = vpop.f32.mrb[0].mxu0
        %v553 = vadd.f32 %v435, %v552
        %v554 = vpop.f32.mrb[0].mxu0
        %555 = vmatprep.mubr.f32.mxu0 0.0
        %556 = vmatmul.mubr.f32.gmra.mrb[0].mxu0 %v442
        %v557 = vpop.f32.mrb[0].mxu0
        %v558 = vadd.f32 %v435, %v557
        %v559 = vpop.f32.mrb[0].mxu0
        %560 = vmatprep.mubr.f32.mxu0 0.0
        %561 = vmatmul.mubr.f32.gmra.mrb[0].mxu0 %v445
        %v562 = vpop.f32.mrb[0].mxu0
        %v563 = vadd.f32 %v435, %v562
        %v564 = vpop.f32.mrb[0].mxu0
        %565 = vmatprep.mubr.f32.mxu0 0.0
        %566 = vmatmul.mubr.f32.gmra.mrb[0].mxu0 %v448
        %v567 = vpop.f32.mrb[0].mxu0
        %v568 = vadd.f32 %v435, %v567
        %v569 = vpop.f32.mrb[0].mxu0
        %570 = vmatprep.mubr.f32.mxu0 0.0
        %571 = vmatmul.mubr.f32.gmra.mrb[0].mxu0 %v451
        %v572 = vpop.f32.mrb[0].mxu0
        %v573 = vadd.f32 %v435, %v572
        %v574 = vpop.f32.mrb[0].mxu0
        %575 = vmatprep.mubr.f32.mxu0 0.0
        %576 = vmatmul.mubr.f32.gmra.mrb[0].mxu0 %v454
        %v577 = vpop.f32.mrb[0].mxu0
        %v578 = vadd.f32 %v435, %v577
        %v579 = vpop.f32.mrb[0].mxu0
        %580 = vmatprep.mubr.f32.mxu0 0.0
        %581 = vmatmul.mubr.f32.gmra.mrb[0].mxu0 %v457
        %v582 = vpop.f32.mrb[0].mxu0
        %v583 = vadd.f32 %v435, %v582
        %v584 = vpop.f32.mrb[0].mxu0
        %585 = vmatprep.mubr.f32.mxu0 0.0
        %586 = vmatmul.mubr.f32.gmra.mrb[0].mxu0 %v460
        %v587 = vpop.f32.mrb[0].mxu0
        %v588 = vadd.f32 %v435, %v587
        %v589 = vpop.f32.mrb[0].mxu0
        %590 = vmatprep.mubr.f32.mxu0 0.0
        %591 = vmatmul.mubr.f32.gmra.mrb[0].mxu0 %v463
        %v592 = vpop.f32.mrb[0].mxu0
        %v593 = vadd.f32 %v435, %v592
        %v594 = vpop.f32.mrb[0].mxu0
        %595 = vmatprep.mubr.f32.mxu0 0.0
        %596 = vmatmul.mubr.f32.gmra.mrb[0].mxu0 %v466
        %v597 = vpop.f32.mrb[0].mxu0
        %v598 = vadd.f32 %v435, %v597
        %v599 = vpop.f32.mrb[0].mxu0
        %600 = vmatprep.mubr.f32.mxu0 0.0
        %601 = vmatmul.mubr.f32.gmra.mrb[0].mxu0 %v469
        %v602 = vpop.f32.mrb[0].mxu0
        %v603 = vadd.f32 %v435, %v602
        %v604 = vpop.f32.mrb[0].mxu0
        %605 = vmatprep.mubr.f32.mxu0 0.0
        %606 = vmatmul.mubr.f32.gmra.mrb[0].mxu0 %v472
        %v607 = vpop.f32.mrb[0].mxu0
        %v608 = vadd.f32 %v435, %v607
        %v609 = vpop.f32.mrb[0].mxu0
        %610 = vmatprep.mubr.f32.mxu0 0.0
        %611 = vmatmul.mubr.f32.gmra.mrb[0].mxu0 %v475
        %v612 = vpop.f32.mrb[0].mxu0
        %v613 = vadd.f32 %v435, %v612
        %v614 = vpop.f32.mrb[0].mxu0
        %615 = vmatprep.mubr.f32.mxu0 0.0
        %616 = vmatmul.mubr.f32.gmra.mrb[0].mxu0 %v478
        %v617 = vpop.f32.mrb[0].mxu0
        %v618 = vadd.f32 %v435, %v617
        %v619 = vpop.f32.mrb[0].mxu0
        %620 = vmatprep.mubr.f32.mxu0 0.0
        %621 = vmatmul.mubr.f32.gmra.mrb[0].mxu0 %v481
        %v622 = vpop.f32.mrb[0].mxu0
        %v623 = vadd.f32 %v435, %v622
        %v624 = vpop.f32.mrb[0].mxu0
        %625 = vmatprep.mubr.f32.mxu0 0.0
        %626 = vmatmul.mubr.f32.gmra.mrb[0].mxu0 %v484
        %v627 = vpop.f32.mrb[0].mxu0
        %v628 = vadd.f32 %v435, %v627
        %v629 = vpop.f32.mrb[0].mxu0
        %630 = vdwg.mxu0
        %v631 = vmax.f32 %v553, 0.0
        %v632 = vmax.f32 %v558, 0.0
        %v633 = vmax.f32 %v563, 0.0
        %v634 = vmax.f32 %v568, 0.0
        %v635 = vmax.f32 %v573, 0.0
        %v636 = vmax.f32 %v578, 0.0
        %v637 = vmax.f32 %v583, 0.0
        %v638 = vmax.f32 %v588, 0.0
        %v639 = vmax.f32 %v593, 0.0
        %v640 = vmax.f32 %v598, 0.0
        %v641 = vmax.f32 %v603, 0.0
        %v642 = vmax.f32 %v608, 0.0
        %v643 = vmax.f32 %v613, 0.0
        %v644 = vmax.f32 %v618, 0.0
        %v645 = vmax.f32 %v623, 0.0
        %v646 = vmax.f32 %v628, 0.0
        %v647 = vld [vmem:[%s397] sm:$0xff]
        %v648 = vld [vmem:[%s397 + $0x8] sm:$0xff]
        %v649 = vld [vmem:[%s397 + $0x10] sm:$0xff]
        %v650 = vld [vmem:[%s397 + $0x18] sm:$0xff]
        %v651 = vld [vmem:[%s397 + $0x20] sm:$0xff]
        %v652 = vld [vmem:[%s397 + $0x28] sm:$0xff]
        %v653 = vld [vmem:[%s397 + $0x30] sm:$0xff]
        %v654 = vld [vmem:[%s397 + $0x38] sm:$0xff]
        %v655 = vld [vmem:[%s400] sm:$0x1]
        %v657 = vlaneseq
        %v658 = vshrl.u32 %v657, 7
        %v659 = vsub.s32 0, %v658
        %v660 = vrot.slane %v655, %v659
        %vm662 = vcmask 523264
        %v664 = vsel %vm662, %v631, 0
        %v667 = vsel %vm662, %v632, 0
        %v670 = vsel %vm662, %v633, 0
        %v673 = vsel %vm662, %v634, 0
        %v676 = vsel %vm662, %v635, 0
        %v679 = vsel %vm662, %v636, 0
        %v682 = vsel %vm662, %v637, 0
        %v685 = vsel %vm662, %v638, 0
        %v688 = vsel %vm662, %v639, 0
        %v691 = vsel %vm662, %v640, 0
        %v694 = vsel %vm662, %v641, 0
        %v697 = vsel %vm662, %v642, 0
        %v700 = vsel %vm662, %v643, 0
        %v703 = vsel %vm662, %v644, 0
        %v706 = vsel %vm662, %v645, 0
        %v709 = vsel %vm662, %v646, 0
        %711 = vmatprep.subr.mxu0 0.0
        %712 = vmatpush1.msra.mxu0 %v647
        %713 = vmatprep.subr.mxu0 0.0
        %714 = vmatpush1.msra.mxu0 %v648
        %715 = vmatprep.subr.mxu0 0.0
        %716 = vmatpush1.msra.mxu0 %v649
        %717 = vmatprep.subr.mxu0 0.0
        %718 = vmatpush1.msra.mxu0 %v650
        %719 = vmatprep.subr.mxu0 0.0
        %720 = vmatpush1.msra.mxu0 %v651
        %721 = vmatprep.subr.mxu0 0.0
        %722 = vmatpush1.msra.mxu0 %v652
        %723 = vmatprep.subr.mxu0 0.0
        %724 = vmatpush1.msra.mxu0 %v653
        %725 = vmatprep.subr.mxu0 0.0
        %726 = vmatpush1.msra.mxu0 %v654
        %727 = vmatprep.subr.mxu0 0.0
        %728 = vmatpush1.msra.mxu0 0.0
        %729 = vmatprep.subr.mxu0 0.0
        %730 = vmatpush1.msra.mxu0 0.0
        %731 = vmatprep.subr.mxu0 0.0
        %732 = vmatpush1.msra.mxu0 0.0
        %733 = vmatprep.subr.mxu0 0.0
        %734 = vmatpush1.msra.mxu0 0.0
        %735 = vmatprep.subr.mxu0 0.0
        %736 = vmatpush1.msra.mxu0 0.0
        %737 = vmatprep.subr.mxu0 0.0
        %738 = vmatpush1.msra.mxu0 0.0
        %739 = vmatprep.subr.mxu0 0.0
        %740 = vmatpush1.msra.mxu0 0.0
        %741 = vmatprep.subr.mxu0 0.0
        %742 = vmatpush1.msra.mxu0 0.0
        %743 = vmatprep.subr.mxu0 0.0
        %744 = vmatpush1.msra.mxu0 0.0
        %745 = vmatprep.subr.mxu0 0.0
        %746 = vmatpush1.msra.mxu0 0.0
        %747 = vmatprep.subr.mxu0 0.0
        %748 = vmatpush1.msra.mxu0 0.0
        %749 = vmatprep.subr.mxu0 0.0
        %750 = vmatpush1.msra.mxu0 0.0
        %751 = vmatprep.subr.mxu0 0.0
        %752 = vmatpush1.msra.mxu0 0.0
        %753 = vmatprep.subr.mxu0 0.0
        %754 = vmatpush1.msra.mxu0 0.0
        %755 = vmatprep.subr.mxu0 0.0
        %756 = vmatpush1.msra.mxu0 0.0
        %757 = vmatprep.subr.mxu0 0.0
        %758 = vmatpush1.msra.mxu0 0.0
        %759 = vmatprep.subr.mxu0 0.0
        %760 = vmatpush1.msra.mxu0 0.0
        %761 = vmatprep.subr.mxu0 0.0
        %762 = vmatpush1.msra.mxu0 0.0
        %763 = vmatprep.subr.mxu0 0.0
        %764 = vmatpush1.msra.mxu0 0.0
        %765 = vmatprep.subr.mxu0 0.0
        %766 = vmatpush1.msra.mxu0 0.0
        %767 = vmatprep.subr.mxu0 0.0
        %768 = vmatpush1.msra.mxu0 0.0
        %769 = vmatprep.subr.mxu0 0.0
        %770 = vmatpush1.msra.mxu0 0.0
        %771 = vmatprep.subr.mxu0 0.0
        %772 = vmatpush1.msra.mxu0 0.0
        %773 = vmatprep.subr.mxu0 0.0
        %774 = vmatpush1.msra.mxu0 0.0
        %775 = vmatprep.mubr.f32.mxu0 0.0
        %776 = vmatmul.mubr.f32.gmra.mrb[0].mxu0 %v664
        %v777 = vpop.f32.mrb[0].mxu0
        %v778 = vadd.f32 %v660, %v777
        %v779 = vpop.f32.mrb[0].mxu0
        %780 = vmatprep.mubr.f32.mxu0 0.0
        %781 = vmatmul.mubr.f32.gmra.mrb[0].mxu0 %v667
        %v782 = vpop.f32.mrb[0].mxu0
        %v783 = vadd.f32 %v660, %v782
        %v784 = vpop.f32.mrb[0].mxu0
        %785 = vmatprep.mubr.f32.mxu0 0.0
        %786 = vmatmul.mubr.f32.gmra.mrb[0].mxu0 %v670
        %v787 = vpop.f32.mrb[0].mxu0
        %v788 = vadd.f32 %v660, %v787
        %v789 = vpop.f32.mrb[0].mxu0
        %790 = vmatprep.mubr.f32.mxu0 0.0
        %791 = vmatmul.mubr.f32.gmra.mrb[0].mxu0 %v673
        %v792 = vpop.f32.mrb[0].mxu0
        %v793 = vadd.f32 %v660, %v792
        %v794 = vpop.f32.mrb[0].mxu0
        %795 = vmatprep.mubr.f32.mxu0 0.0
        %796 = vmatmul.mubr.f32.gmra.mrb[0].mxu0 %v676
        %v797 = vpop.f32.mrb[0].mxu0
        %v798 = vadd.f32 %v660, %v797
        %v799 = vpop.f32.mrb[0].mxu0
        %800 = vmatprep.mubr.f32.mxu0 0.0
        %801 = vmatmul.mubr.f32.gmra.mrb[0].mxu0 %v679
        %v802 = vpop.f32.mrb[0].mxu0
        %v803 = vadd.f32 %v660, %v802
        %v804 = vpop.f32.mrb[0].mxu0
        %805 = vmatprep.mubr.f32.mxu0 0.0
        %806 = vmatmul.mubr.f32.gmra.mrb[0].mxu0 %v682
        %v807 = vpop.f32.mrb[0].mxu0
        %v808 = vadd.f32 %v660, %v807
        %v809 = vpop.f32.mrb[0].mxu0
        %810 = vmatprep.mubr.f32.mxu0 0.0
        %811 = vmatmul.mubr.f32.gmra.mrb[0].mxu0 %v685
        %v812 = vpop.f32.mrb[0].mxu0
        %v813 = vadd.f32 %v660, %v812
        %v814 = vpop.f32.mrb[0].mxu0
        %815 = vmatprep.mubr.f32.mxu0 0.0
        %816 = vmatmul.mubr.f32.gmra.mrb[0].mxu0 %v688
        %v817 = vpop.f32.mrb[0].mxu0
        %v818 = vadd.f32 %v660, %v817
        %v819 = vpop.f32.mrb[0].mxu0
        %820 = vmatprep.mubr.f32.mxu0 0.0
        %821 = vmatmul.mubr.f32.gmra.mrb[0].mxu0 %v691
        %v822 = vpop.f32.mrb[0].mxu0
        %v823 = vadd.f32 %v660, %v822
        %v824 = vpop.f32.mrb[0].mxu0
        %825 = vmatprep.mubr.f32.mxu0 0.0
        %826 = vmatmul.mubr.f32.gmra.mrb[0].mxu0 %v694
        %v827 = vpop.f32.mrb[0].mxu0
        %v828 = vadd.f32 %v660, %v827
        %v829 = vpop.f32.mrb[0].mxu0
        %830 = vmatprep.mubr.f32.mxu0 0.0
        %831 = vmatmul.mubr.f32.gmra.mrb[0].mxu0 %v697
        %v832 = vpop.f32.mrb[0].mxu0
        %v833 = vadd.f32 %v660, %v832
        %v834 = vpop.f32.mrb[0].mxu0
        %835 = vmatprep.mubr.f32.mxu0 0.0
        %836 = vmatmul.mubr.f32.gmra.mrb[0].mxu0 %v700
        %v837 = vpop.f32.mrb[0].mxu0
        %v838 = vadd.f32 %v660, %v837
        %v839 = vpop.f32.mrb[0].mxu0
        %840 = vmatprep.mubr.f32.mxu0 0.0
        %841 = vmatmul.mubr.f32.gmra.mrb[0].mxu0 %v703
        %v842 = vpop.f32.mrb[0].mxu0
        %v843 = vadd.f32 %v660, %v842
        %v844 = vpop.f32.mrb[0].mxu0
        %845 = vmatprep.mubr.f32.mxu0 0.0
        %846 = vmatmul.mubr.f32.gmra.mrb[0].mxu0 %v706
        %v847 = vpop.f32.mrb[0].mxu0
        %v848 = vadd.f32 %v660, %v847
        %v849 = vpop.f32.mrb[0].mxu0
        %850 = vmatprep.mubr.f32.mxu0 0.0
        %851 = vmatmul.mubr.f32.gmra.mrb[0].mxu0 %v709
        %v852 = vpop.f32.mrb[0].mxu0
        %v853 = vadd.f32 %v660, %v852
        %v854 = vpop.f32.mrb[0].mxu0
        %855 = vdwg.mxu0
        %v856 = vmax.f32 %v778, 0.0
        %v857 = vmax.f32 %v783, 0.0
        %v858 = vmax.f32 %v788, 0.0
        %v859 = vmax.f32 %v793, 0.0
        %v860 = vmax.f32 %v798, 0.0
        %v861 = vmax.f32 %v803, 0.0
        %v862 = vmax.f32 %v808, 0.0
        %v863 = vmax.f32 %v813, 0.0
        %v864 = vmax.f32 %v818, 0.0
        %v865 = vmax.f32 %v823, 0.0
        %v866 = vmax.f32 %v828, 0.0
        %v867 = vmax.f32 %v833, 0.0
        %v868 = vmax.f32 %v838, 0.0
        %v869 = vmax.f32 %v843, 0.0
        %v870 = vmax.f32 %v848, 0.0
        %v871 = vmax.f32 %v853, 0.0
        %v872 = vld [vmem:[%s405] sm:$0xff]
        %v873 = vld [vmem:[%s405 + $0x8] sm:$0xff]
        %v874 = vld [vmem:[%s405 + $0x10] sm:$0xff]
        %v875 = vld [vmem:[%s405 + $0x18] sm:$0xff]
        %v876 = vld [vmem:[%s405 + $0x20] sm:$0xff]
        %v877 = vld [vmem:[%s405 + $0x28] sm:$0xff]
        %v878 = vld [vmem:[%s405 + $0x30] sm:$0xff]
        %v879 = vld [vmem:[%s405 + $0x38] sm:$0xff]
        %v880 = vld [vmem:[%s408] sm:$0x1]
        %v882 = vlaneseq
        %v883 = vshrl.u32 %v882, 7
        %v884 = vsub.s32 0, %v883
        %v885 = vrot.slane %v880, %v884
        %v888 = vsel %vm662, %v856, 0
        %v891 = vsel %vm662, %v857, 0
        %v894 = vsel %vm662, %v858, 0
        %v897 = vsel %vm662, %v859, 0
        %v900 = vsel %vm662, %v860, 0
        %v903 = vsel %vm662, %v861, 0
        %v906 = vsel %vm662, %v862, 0
        %v909 = vsel %vm662, %v863, 0
        %v912 = vsel %vm662, %v864, 0
        %v915 = vsel %vm662, %v865, 0
        %v918 = vsel %vm662, %v866, 0
        %v921 = vsel %vm662, %v867, 0
        %v924 = vsel %vm662, %v868, 0
        %v927 = vsel %vm662, %v869, 0
        %v930 = vsel %vm662, %v870, 0
        %v933 = vsel %vm662, %v871, 0
        %935 = vmatprep.subr.mxu0 0.0
        %936 = vmatpush1.msra.mxu0 %v872
        %937 = vmatprep.subr.mxu0 0.0
        %938 = vmatpush1.msra.mxu0 %v873
        %939 = vmatprep.subr.mxu0 0.0
        %940 = vmatpush1.msra.mxu0 %v874
        %941 = vmatprep.subr.mxu0 0.0
        %942 = vmatpush1.msra.mxu0 %v875
        %943 = vmatprep.subr.mxu0 0.0
        %944 = vmatpush1.msra.mxu0 %v876
        %945 = vmatprep.subr.mxu0 0.0
        %946 = vmatpush1.msra.mxu0 %v877
        %947 = vmatprep.subr.mxu0 0.0
        %948 = vmatpush1.msra.mxu0 %v878
        %949 = vmatprep.subr.mxu0 0.0
        %950 = vmatpush1.msra.mxu0 %v879
        %951 = vmatprep.subr.mxu0 0.0
        %952 = vmatpush1.msra.mxu0 0.0
        %953 = vmatprep.subr.mxu0 0.0
        %954 = vmatpush1.msra.mxu0 0.0
        %955 = vmatprep.subr.mxu0 0.0
        %956 = vmatpush1.msra.mxu0 0.0
        %957 = vmatprep.subr.mxu0 0.0
        %958 = vmatpush1.msra.mxu0 0.0
        %959 = vmatprep.subr.mxu0 0.0
        %960 = vmatpush1.msra.mxu0 0.0
        %961 = vmatprep.subr.mxu0 0.0
        %962 = vmatpush1.msra.mxu0 0.0
        %963 = vmatprep.subr.mxu0 0.0
        %964 = vmatpush1.msra.mxu0 0.0
        %965 = vmatprep.subr.mxu0 0.0
        %966 = vmatpush1.msra.mxu0 0.0
        %967 = vmatprep.subr.mxu0 0.0
        %968 = vmatpush1.msra.mxu0 0.0
        %969 = vmatprep.subr.mxu0 0.0
        %970 = vmatpush1.msra.mxu0 0.0
        %971 = vmatprep.subr.mxu0 0.0
        %972 = vmatpush1.msra.mxu0 0.0
        %973 = vmatprep.subr.mxu0 0.0
        %974 = vmatpush1.msra.mxu0 0.0
        %975 = vmatprep.subr.mxu0 0.0
        %976 = vmatpush1.msra.mxu0 0.0
        %977 = vmatprep.subr.mxu0 0.0
        %978 = vmatpush1.msra.mxu0 0.0
        %979 = vmatprep.subr.mxu0 0.0
        %980 = vmatpush1.msra.mxu0 0.0
        %981 = vmatprep.subr.mxu0 0.0
        %982 = vmatpush1.msra.mxu0 0.0
        %983 = vmatprep.subr.mxu0 0.0
        %984 = vmatpush1.msra.mxu0 0.0
        %985 = vmatprep.subr.mxu0 0.0
        %986 = vmatpush1.msra.mxu0 0.0
        %987 = vmatprep.subr.mxu0 0.0
        %988 = vmatpush1.msra.mxu0 0.0
        %989 = vmatprep.subr.mxu0 0.0
        %990 = vmatpush1.msra.mxu0 0.0
        %991 = vmatprep.subr.mxu0 0.0
        %992 = vmatpush1.msra.mxu0 0.0
        %993 = vmatprep.subr.mxu0 0.0
        %994 = vmatpush1.msra.mxu0 0.0
        %995 = vmatprep.subr.mxu0 0.0
        %996 = vmatpush1.msra.mxu0 0.0
        %997 = vmatprep.subr.mxu0 0.0
        %998 = vmatpush1.msra.mxu0 0.0
        %999 = vmatprep.mubr.f32.mxu0 0.0
        %1000 = vmatmul.mubr.f32.gmra.mrb[0].mxu0 %v888
        %v1001 = vpop.f32.mrb[0].mxu0
        %v1002 = vadd.f32 %v885, %v1001
        %v1003 = vpop.f32.mrb[0].mxu0
        %1004 = vmatprep.mubr.f32.mxu0 0.0
        %1005 = vmatmul.mubr.f32.gmra.mrb[0].mxu0 %v891
        %v1006 = vpop.f32.mrb[0].mxu0
        %v1007 = vadd.f32 %v885, %v1006
        %v1008 = vpop.f32.mrb[0].mxu0
        %1009 = vmatprep.mubr.f32.mxu0 0.0
        %1010 = vmatmul.mubr.f32.gmra.mrb[0].mxu0 %v894
        %v1011 = vpop.f32.mrb[0].mxu0
        %v1012 = vadd.f32 %v885, %v1011
        %v1013 = vpop.f32.mrb[0].mxu0
        %1014 = vmatprep.mubr.f32.mxu0 0.0
        %1015 = vmatmul.mubr.f32.gmra.mrb[0].mxu0 %v897
        %v1016 = vpop.f32.mrb[0].mxu0
        %v1017 = vadd.f32 %v885, %v1016
        %v1018 = vpop.f32.mrb[0].mxu0
        %1019 = vmatprep.mubr.f32.mxu0 0.0
        %1020 = vmatmul.mubr.f32.gmra.mrb[0].mxu0 %v900
        %v1021 = vpop.f32.mrb[0].mxu0
        %v1022 = vadd.f32 %v885, %v1021
        %v1023 = vpop.f32.mrb[0].mxu0
        %1024 = vmatprep.mubr.f32.mxu0 0.0
        %1025 = vmatmul.mubr.f32.gmra.mrb[0].mxu0 %v903
        %v1026 = vpop.f32.mrb[0].mxu0
        %v1027 = vadd.f32 %v885, %v1026
        %v1028 = vpop.f32.mrb[0].mxu0
        %1029 = vmatprep.mubr.f32.mxu0 0.0
        %1030 = vmatmul.mubr.f32.gmra.mrb[0].mxu0 %v906
        %v1031 = vpop.f32.mrb[0].mxu0
        %v1032 = vadd.f32 %v885, %v1031
        %v1033 = vpop.f32.mrb[0].mxu0
        %1034 = vmatprep.mubr.f32.mxu0 0.0
        %1035 = vmatmul.mubr.f32.gmra.mrb[0].mxu0 %v909
        %v1036 = vpop.f32.mrb[0].mxu0
        %v1037 = vadd.f32 %v885, %v1036
        %v1038 = vpop.f32.mrb[0].mxu0
        %1039 = vmatprep.mubr.f32.mxu0 0.0
        %1040 = vmatmul.mubr.f32.gmra.mrb[0].mxu0 %v912
        %v1041 = vpop.f32.mrb[0].mxu0
        %v1042 = vadd.f32 %v885, %v1041
        %v1043 = vpop.f32.mrb[0].mxu0
        %1044 = vmatprep.mubr.f32.mxu0 0.0
        %1045 = vmatmul.mubr.f32.gmra.mrb[0].mxu0 %v915
        %v1046 = vpop.f32.mrb[0].mxu0
        %v1047 = vadd.f32 %v885, %v1046
        %v1048 = vpop.f32.mrb[0].mxu0
        %1049 = vmatprep.mubr.f32.mxu0 0.0
        %1050 = vmatmul.mubr.f32.gmra.mrb[0].mxu0 %v918
        %v1051 = vpop.f32.mrb[0].mxu0
        %v1052 = vadd.f32 %v885, %v1051
        %v1053 = vpop.f32.mrb[0].mxu0
        %1054 = vmatprep.mubr.f32.mxu0 0.0
        %1055 = vmatmul.mubr.f32.gmra.mrb[0].mxu0 %v921
        %v1056 = vpop.f32.mrb[0].mxu0
        %v1057 = vadd.f32 %v885, %v1056
        %v1058 = vpop.f32.mrb[0].mxu0
        %1059 = vmatprep.mubr.f32.mxu0 0.0
        %1060 = vmatmul.mubr.f32.gmra.mrb[0].mxu0 %v924
        %v1061 = vpop.f32.mrb[0].mxu0
        %v1062 = vadd.f32 %v885, %v1061
        %v1063 = vpop.f32.mrb[0].mxu0
        %1064 = vmatprep.mubr.f32.mxu0 0.0
        %1065 = vmatmul.mubr.f32.gmra.mrb[0].mxu0 %v927
        %v1066 = vpop.f32.mrb[0].mxu0
        %v1067 = vadd.f32 %v885, %v1066
        %v1068 = vpop.f32.mrb[0].mxu0
        %1069 = vmatprep.mubr.f32.mxu0 0.0
        %1070 = vmatmul.mubr.f32.gmra.mrb[0].mxu0 %v930
        %v1071 = vpop.f32.mrb[0].mxu0
        %v1072 = vadd.f32 %v885, %v1071
        %v1073 = vpop.f32.mrb[0].mxu0
        %1074 = vmatprep.mubr.f32.mxu0 0.0
        %1075 = vmatmul.mubr.f32.gmra.mrb[0].mxu0 %v933
        %v1076 = vpop.f32.mrb[0].mxu0
        %v1077 = vadd.f32 %v885, %v1076
        %v1078 = vpop.f32.mrb[0].mxu0
        %1079 = vdwg.mxu0
        %1080 = vst [vmem:[%s374] sm:$0xff] %v1002
        %1081 = vst [vmem:[%s374 + $0x8] sm:$0xff] %v1007
        %1082 = vst [vmem:[%s374 + $0x10] sm:$0xff] %v1012
        %1083 = vst [vmem:[%s374 + $0x18] sm:$0xff] %v1017
        %1084 = vst [vmem:[%s374 + $0x20] sm:$0xff] %v1022
        %1085 = vst [vmem:[%s374 + $0x28] sm:$0xff] %v1027
        %1086 = vst [vmem:[%s374 + $0x30] sm:$0xff] %v1032
        %1087 = vst [vmem:[%s374 + $0x38] sm:$0xff] %v1037
        %1088 = vst [vmem:[%s374 + $0x40] sm:$0xff] %v1042
        %1089 = vst [vmem:[%s374 + $0x48] sm:$0xff] %v1047
        %1090 = vst [vmem:[%s374 + $0x50] sm:$0xff] %v1052
        %1091 = vst [vmem:[%s374 + $0x58] sm:$0xff] %v1057
        %1092 = vst [vmem:[%s374 + $0x60] sm:$0xff] %v1062
        %1093 = vst [vmem:[%s374 + $0x68] sm:$0xff] %v1067
        %1094 = vst [vmem:[%s374 + $0x70] sm:$0xff] %v1072
        %1095 = vst [vmem:[%s374 + $0x78] sm:$0xff] %v1077
        %s1096 = sand.u32 %s227, 1
        %s1097 = scalar_lea.sflag [#allocation3], %s1096
        %s1098 = sand.u32 %s227, 1
        %s1099 = smul.addr %s1098, 128
        %s1100 = scalar_lea.vmem [#allocation2], %s1099
        // Predicated region
        $region49: #{tpu_custom_call.1} parent=47 // pred_check
          %p1101 = pneg %p237
        $region50: #{tpu_custom_call.1} parent=47 // pred_check_branch
          %1103 = sbr.rel (%p1101) target = $region52
        $region51: #{tpu_custom_call.1} parent=47 // pred_region
          %s1104 = smul.u32 16, %s26
          %s1106 = ssub.s32 2048, 2048
          %1107 = vsyncadd %s1097, %s1106
          %s1108 = smul.addr %s25, 16
          %s1109 = sadd.s32 %s1104, %s1108
          %s1110 = smul.addr %s1109, 128
          %s1111 = scalar_lea.hbm %s7, %s1110
          %s1112 = sshll.u32 %s1100, 4
          %s1113 = int_to_ptr.vmem [resolvable:$true] %s1112
          %1118 = dma.vmem_to_hbm [thread:$0]  %s1113, 2048, %s1111, %s1097, 128, 128, 8
        $region52: #{tpu_custom_call.1} parent=47 // pred_fallthru
          _
      $region48: #{tpu_custom_call.1} parent=5 // pred_fallthru
        _
      %p1119 = scmp.le.s32.totalorder 2, %s16
      // Predicated region
      $region53: #{tpu_custom_call.1} parent=5 // pred_check
        %p1120 = pneg %p1119
      $region54: #{tpu_custom_call.1} parent=5 // pred_check_branch
        %1122 = sbr.rel (%p1120) target = $region56
      $region55: #{tpu_custom_call.1} parent=5 // pred_region
        %s1123 = ssub.s32 %s16, 2
        // Predicated region
        $region57: #{tpu_custom_call.1} parent=55 // pred_check
          %p1124 = pneg %p243
        $region58: #{tpu_custom_call.1} parent=55 // pred_check_branch
          %1126 = sbr.rel (%p1124) target = $region60
        $region59: #{tpu_custom_call.1} parent=55 // pred_region
          %s1127 = sand.u32 %s228, 1
          %s1128 = scalar_lea.sflag [#allocation3], %s1127
          %s1129 = sand.u32 %s228, 1
          %s1130 = smul.addr %s1129, 128
          %s1131 = scalar_lea.vmem [#allocation2], %s1130
          %1132 = dma.done %s1128, 2048
        $region60: #{tpu_custom_call.1} parent=55 // pred_fallthru
          _
      $region56: #{tpu_custom_call.1} parent=5 // pred_fallthru
        _
    $region6: #{tpu_custom_call.1} parent=1 // loop_footer
      %s20 = sadd.s32 1, %s16
    $region7: #{tpu_custom_call.1} parent=1 // loop_footer_branch
      %15 = sbr.rel target = $region3
    $region8: #{tpu_custom_call.1} parent=1 // loop_exit
      _
    %1133 = vsyncpa [#allocation3], 1
    %s1134 = scalar_lea.sflag [#allocation3], 1
    %1135 = vsyncpa %s1134, 1

</llo_original>
